<compile_context>
chip_gen: v6e
topology: v6e:2x2x1
jax: 0.10.0
libtpu: 0.0.40
codegen_flags: <defaults>
</compile_context>

<pallas_src>
import jax
import jax.numpy as jnp
from jax.experimental import pallas as pl
from jax.experimental.pallas import tpu as pltpu

HIDDEN = 64
BN_EPS = 1e-5
LANES = 128


def neural_network_forward(x, params, *, tile_rows=512):
    """x: (B, input_dim) f32 -> logits (B, num_cls) f32."""
    w1, b1, gamma, beta, w2, b2 = params
    del b1  # mathematically cancelled by training-mode BatchNorm mean subtraction
    batch, in_dim = x.shape
    hidden, num_cls = w2.shape

    # ---- lane-dense output: pad the logits dim up to a multiple of 128 -----
    ncp = max(LANES, ((num_cls + LANES - 1) // LANES) * LANES)
    w2p = jnp.pad(w2, ((0, 0), (0, ncp - num_cls)))
    b2p = jnp.pad(b2, ((0, 0), (0, ncp - num_cls)))

    # ---- batch tiling: sublane-aligned tiles, zero-pad the remainder -------
    if batch <= tile_rows:
        tb = ((batch + 7) // 8) * 8          # single tile, sublane aligned
    else:
        tb = tile_rows
    padded = ((batch + tb - 1) // tb) * tb
    # zero rows => h = 0 @ w1 = 0 exactly (no b1), so they do not perturb stats
    xp = jnp.pad(x, ((0, padded - batch), (0, 0)))
    n_tiles = padded // tb
    inv_n = 1.0 / float(batch)               # true batch for mean / biased var

    def kernel(x_ref, w1_ref, g_ref, bt_ref, w2_ref, b2_ref, out_ref,
               s_ref, t_ref):
        phase = pl.program_id(0)
        tile = pl.program_id(1)
        last_tile = pl.num_programs(1) - 1

        # shared first matmul (MXU), f32 accumulation
        h = jnp.dot(x_ref[...], w1_ref[...], preferred_element_type=jnp.float32)

        @pl.when((phase == 0) & (tile == 0))
        def _init():
            s_ref[...] = jnp.zeros_like(s_ref)
            t_ref[...] = jnp.zeros_like(t_ref)

        @pl.when(phase == 0)
        def _accumulate():
            # single sweep of the tile: per-feature sum and sum of squares
            s_ref[...] += jnp.sum(h, axis=0, keepdims=True)
            t_ref[...] += jnp.sum(h * h, axis=0, keepdims=True)

        @pl.when((phase == 0) & (tile == last_tile))
        def _finalize_stats():
            mean = s_ref[...] * inv_n
            var = t_ref[...] * inv_n - mean * mean           # biased variance
            scale = g_ref[...] * jax.lax.rsqrt(var + BN_EPS)  # EUP rsqrt (free slot)
            s_ref[...] = scale                                # reuse scratch: BN scale
            t_ref[...] = bt_ref[...] - mean * scale           # reuse scratch: BN shift

        @pl.when(phase == 1)
        def _apply():
            # fused BN affine + ReLU + second matmul into a 128-wide padded output
            a = jnp.maximum(h * s_ref[...] + t_ref[...], 0.0)
            out_ref[...] = jnp.dot(a, w2_ref[...],
                                   preferred_element_type=jnp.float32) + b2_ref[...]

    out = pl.pallas_call(
        kernel,
        out_shape=jax.ShapeDtypeStruct((padded, ncp), jnp.float32),
        grid_spec=pltpu.PrefetchScalarGridSpec(
            num_scalar_prefetch=0,
            grid=(2, n_tiles),                                    # (phase, batch tile)
            in_specs=[
                pl.BlockSpec((tb, in_dim), lambda p, t: (t, 0)),       # x: streamed
                pl.BlockSpec((in_dim, hidden), lambda p, t: (0, 0)),   # w1: resident
                pl.BlockSpec((1, hidden), lambda p, t: (0, 0)),        # gamma
                pl.BlockSpec((1, hidden), lambda p, t: (0, 0)),        # beta
                pl.BlockSpec((hidden, ncp), lambda p, t: (0, 0)),      # w2 (lane-padded)
                pl.BlockSpec((1, ncp), lambda p, t: (0, 0)),           # b2 (lane-padded)
            ],
            # Phase 0 pins the output to block 0 and never writes it, so each
            # output block is DMA'd back exactly once, after phase 1 fills it.
            out_specs=pl.BlockSpec((tb, ncp), lambda p, t: (p * t, 0)),
            scratch_shapes=[pltpu.VMEM((1, hidden), jnp.float32),   # sum   -> scale
                            pltpu.VMEM((1, hidden), jnp.float32)],  # sumsq -> shift
        ),
        compiler_params=pltpu.CompilerParams(
            # phase axis is strictly sequential; the tile axis carries the
            # stats reduction in phase 0 -> keep both "arbitrary".
            dimension_semantics=("arbitrary", "arbitrary"),
            vmem_limit_bytes=32 * 1024 * 1024,
        ),
    )(xp, w1, gamma, beta, w2p, b2p)

    return out[:batch, :num_cls]


def init_params(key, input_dim, num_cls):
    """Deterministic PyTorch-style (Kaiming-uniform-ish) init."""
    k1, k2, k3, k4 = jax.random.split(key, 4)
    bound1 = 1.0 / (input_dim ** 0.5)
    w1 = jax.random.uniform(k1, (input_dim, HIDDEN), jnp.float32,
                            minval=-bound1, maxval=bound1)
    b1 = jax.random.uniform(k2, (1, HIDDEN), jnp.float32,
                            minval=-bound1, maxval=bound1)
    gamma = jnp.ones((1, HIDDEN), jnp.float32)   # BatchNorm1d weight
    beta = jnp.zeros((1, HIDDEN), jnp.float32)   # BatchNorm1d bias
    bound2 = 1.0 / (HIDDEN ** 0.5)
    w2 = jax.random.uniform(k3, (HIDDEN, num_cls), jnp.float32,
                            minval=-bound2, maxval=bound2)
    b2 = jax.random.uniform(k4, (1, num_cls), jnp.float32,
                            minval=-bound2, maxval=bound2)
    return (w1, b1, gamma, beta, w2, b2)


def _reference(x, params):
    """Pure-JAX reference of the PyTorch module forward (includes b1)."""
    w1, b1, gamma, beta, w2, b2 = params
    h = x @ w1 + b1
    mean = jnp.mean(h, axis=0, keepdims=True)
    var = jnp.mean((h - mean) ** 2, axis=0, keepdims=True)
    h = (h - mean) / jnp.sqrt(var + BN_EPS) * gamma + beta
    h = jnp.maximum(h, 0.0)
    return h @ w2 + b2


if __name__ == "__main__":
    key = jax.random.PRNGKey(0)
    batch, input_dim, num_cls = 8, 32, 10

    kx, kp = jax.random.split(key)
    x = jax.random.normal(kx, (batch, input_dim), jnp.float32)
    params = init_params(kp, input_dim, num_cls)

    logits = jax.block_until_ready(neural_network_forward(x, params))
    ref = _reference(x, params)
    assert logits.shape == (batch, num_cls)
    assert jnp.allclose(logits, ref, atol=1e-4, rtol=1e-4), \
        float(jnp.max(jnp.abs(logits - ref)))

    # Exercise the multi-tile path (2 batch tiles + zero-row padding).
    x2 = jax.random.normal(jax.random.fold_in(kx, 1), (24, input_dim), jnp.float32)
    logits2 = jax.block_until_ready(
        neural_network_forward(x2, params, tile_rows=16))
    ref2 = _reference(x2, params)
    assert jnp.allclose(logits2, ref2, atol=1e-4, rtol=1e-4), \
        float(jnp.max(jnp.abs(logits2 - ref2)))

    print("KERNEL_OK")
</pallas_src>

<mosaic_0001>
module attributes {stable_mosaic.version = 11 : i64} {
  func.func @kernel(%arg0: i32, %arg1: i32, %arg2: memref<8x32xf32, #tpu.memory_space<vmem>>, %arg3: memref<32x64xf32, #tpu.memory_space<vmem>>, %arg4: memref<1x64xf32, #tpu.memory_space<vmem>>, %arg5: memref<1x64xf32, #tpu.memory_space<vmem>>, %arg6: memref<64x128xf32, #tpu.memory_space<vmem>>, %arg7: memref<1x128xf32, #tpu.memory_space<vmem>>, %arg8: memref<8x128xf32, #tpu.memory_space<vmem>>, %arg9: memref<1x64xf32, #tpu.memory_space<vmem>>, %arg10: memref<1x64xf32, #tpu.memory_space<vmem>>) attributes {dimension_semantics = [#tpu.dimension_semantics<arbitrary>, #tpu.dimension_semantics<arbitrary>], iteration_bounds = array<i64: 2, 1>, scalar_prefetch = 0 : i64, scratch_operands = 2 : i64, tpu.core_type = #tpu.core_type<tc>, window_params = [{transform_indices = @transform_0, window_bounds = array<i64: 8, 32>}, {pipeline_mode = #tpu.pipeline_mode<synchronous>, transform_indices = @transform_1, window_bounds = array<i64: 32, 64>}, {pipeline_mode = #tpu.pipeline_mode<synchronous>, transform_indices = @transform_2, window_bounds = array<i64: 1, 64>}, {pipeline_mode = #tpu.pipeline_mode<synchronous>, transform_indices = @transform_3, window_bounds = array<i64: 1, 64>}, {pipeline_mode = #tpu.pipeline_mode<synchronous>, transform_indices = @transform_4, window_bounds = array<i64: 64, 128>}, {pipeline_mode = #tpu.pipeline_mode<synchronous>, transform_indices = @transform_5, window_bounds = array<i64: 1, 128>}, {transform_indices = @transform_6, window_bounds = array<i64: 8, 128>}]} {
    %c0 = arith.constant 0 : index
    %c0_0 = arith.constant 0 : index
    %0 = vector.load %arg2[%c0, %c0_0] : memref<8x32xf32, #tpu.memory_space<vmem>>, vector<8x32xf32>
    %c0_1 = arith.constant 0 : index
    %c0_2 = arith.constant 0 : index
    %1 = vector.load %arg3[%c0_1, %c0_2] : memref<32x64xf32, #tpu.memory_space<vmem>>, vector<32x64xf32>
    %cst = arith.constant dense<0.000000e+00> : vector<8x64xf32>
    %2 = tpu.matmul %0, %1, %cst {dimension_numbers = #tpu.dot_dimension_numbers<[1], [0], [0], [1], [0, 0, 1, 1], [], []>} : vector<8x32xf32>, vector<32x64xf32>, vector<8x64xf32> -> vector<8x64xf32>
    %c0_i32 = arith.constant 0 : i32
    %3 = arith.cmpi eq, %arg0, %c0_i32 : i32
    %c0_i32_3 = arith.constant 0 : i32
    %4 = arith.cmpi eq, %arg1, %c0_i32_3 : i32
    %5 = arith.andi %3, %4 : i1
    %6 = arith.extui %5 : i1 to i32
    %c0_i32_4 = arith.constant 0 : i32
    %7 = arith.cmpi ne, %6, %c0_i32_4 : i32
    scf.if %7 {
      %cst_11 = arith.constant 0.000000e+00 : f32
      %19 = vector.broadcast %cst_11 : f32 to vector<1x64xf32>
      %c0_12 = arith.constant 0 : index
      %c0_13 = arith.constant 0 : index
      %20 = vector.load %arg9[%c0_12, %c0_13] : memref<1x64xf32, #tpu.memory_space<vmem>>, vector<1x64xf32>
      tpu.vector_store %arg9[%c0_12, %c0_13], %19 {strides = array<i32>} : memref<1x64xf32, #tpu.memory_space<vmem>>, vector<1x64xf32>,
      %cst_14 = arith.constant 0.000000e+00 : f32
      %21 = vector.broadcast %cst_14 : f32 to vector<1x64xf32>
      %c0_15 = arith.constant 0 : index
      %c0_16 = arith.constant 0 : index
      %22 = vector.load %arg10[%c0_15, %c0_16] : memref<1x64xf32, #tpu.memory_space<vmem>>, vector<1x64xf32>
      tpu.vector_store %arg10[%c0_15, %c0_16], %21 {strides = array<i32>} : memref<1x64xf32, #tpu.memory_space<vmem>>, vector<1x64xf32>,
    } else {
    }
    %c0_i32_5 = arith.constant 0 : i32
    %8 = arith.cmpi eq, %arg0, %c0_i32_5 : i32
    %9 = arith.extui %8 : i1 to i32
    %c0_i32_6 = arith.constant 0 : i32
    %10 = arith.cmpi ne, %9, %c0_i32_6 : i32
    scf.if %10 {
      %c0_11 = arith.constant 0 : index
      %c0_12 = arith.constant 0 : index
      %19 = vector.load %arg9[%c0_11, %c0_12] : memref<1x64xf32, #tpu.memory_space<vmem>>, vector<1x64xf32>
      %cst_13 = arith.constant dense<0.000000e+00> : vector<64xf32>
      %20 = vector.multi_reduction <add>, %2, %cst_13 [0] : vector<8x64xf32> to vector<64xf32>
      %21 = vector.shape_cast %20 : vector<64xf32> to vector<1x64xf32>
      %22 = arith.addf %19, %21 : vector<1x64xf32>
      %c0_14 = arith.constant 0 : index
      %c0_15 = arith.constant 0 : index
      %23 = vector.load %arg9[%c0_14, %c0_15] : memref<1x64xf32, #tpu.memory_space<vmem>>, vector<1x64xf32>
      tpu.vector_store %arg9[%c0_14, %c0_15], %22 {strides = array<i32>} : memref<1x64xf32, #tpu.memory_space<vmem>>, vector<1x64xf32>,
      %c0_16 = arith.constant 0 : index
      %c0_17 = arith.constant 0 : index
      %24 = vector.load %arg10[%c0_16, %c0_17] : memref<1x64xf32, #tpu.memory_space<vmem>>, vector<1x64xf32>
      %25 = arith.mulf %2, %2 : vector<8x64xf32>
      %cst_18 = arith.constant dense<0.000000e+00> : vector<64xf32>
      %26 = vector.multi_reduction <add>, %25, %cst_18 [0] : vector<8x64xf32> to vector<64xf32>
      %27 = vector.shape_cast %26 : vector<64xf32> to vector<1x64xf32>
      %28 = arith.addf %24, %27 : vector<1x64xf32>
      %c0_19 = arith.constant 0 : index
      %c0_20 = arith.constant 0 : index
      %29 = vector.load %arg10[%c0_19, %c0_20] : memref<1x64xf32, #tpu.memory_space<vmem>>, vector<1x64xf32>
      tpu.vector_store %arg10[%c0_19, %c0_20], %28 {strides = array<i32>} : memref<1x64xf32, #tpu.memory_space<vmem>>, vector<1x64xf32>,
    } else {
    }
    %c0_i32_7 = arith.constant 0 : i32
    %11 = arith.cmpi eq, %arg0, %c0_i32_7 : i32
    %c0_i32_8 = arith.constant 0 : i32
    %12 = arith.cmpi eq, %arg1, %c0_i32_8 : i32
    %13 = arith.andi %11, %12 : i1
    %14 = arith.extui %13 : i1 to i32
    %c0_i32_9 = arith.constant 0 : i32
    %15 = arith.cmpi ne, %14, %c0_i32_9 : i32
    scf.if %15 {
      %c0_11 = arith.constant 0 : index
      %c0_12 = arith.constant 0 : index
      %19 = vector.load %arg9[%c0_11, %c0_12] : memref<1x64xf32, #tpu.memory_space<vmem>>, vector<1x64xf32>
      %cst_13 = arith.constant 1.250000e-01 : f32
      %20 = vector.broadcast %cst_13 : f32 to vector<1x64xf32>
      %21 = arith.mulf %19, %20 : vector<1x64xf32>
      %c0_14 = arith.constant 0 : index
      %c0_15 = arith.constant 0 : index
      %22 = vector.load %arg10[%c0_14, %c0_15] : memref<1x64xf32, #tpu.memory_space<vmem>>, vector<1x64xf32>
      %cst_16 = arith.constant 1.250000e-01 : f32
      %23 = vector.broadcast %cst_16 : f32 to vector<1x64xf32>
      %24 = arith.mulf %22, %23 : vector<1x64xf32>
      %25 = arith.mulf %21, %21 : vector<1x64xf32>
      %26 = arith.subf %24, %25 : vector<1x64xf32>
      %c0_17 = arith.constant 0 : index
      %c0_18 = arith.constant 0 : index
      %27 = vector.load %arg4[%c0_17, %c0_18] : memref<1x64xf32, #tpu.memory_space<vmem>>, vector<1x64xf32>
      %cst_19 = arith.constant 9.99999974E-6 : f32
      %28 = vector.broadcast %cst_19 : f32 to vector<1x64xf32>
      %29 = arith.addf %26, %28 : vector<1x64xf32>
      %30 = math.rsqrt %29 : vector<1x64xf32>
      %31 = arith.mulf %27, %30 : vector<1x64xf32>
      %c0_20 = arith.constant 0 : index
      %c0_21 = arith.constant 0 : index
      %32 = vector.load %arg9[%c0_20, %c0_21] : memref<1x64xf32, #tpu.memory_space<vmem>>, vector<1x64xf32>
      tpu.vector_store %arg9[%c0_20, %c0_21], %31 {strides = array<i32>} : memref<1x64xf32, #tpu.memory_space<vmem>>, vector<1x64xf32>,
      %c0_22 = arith.constant 0 : index
      %c0_23 = arith.constant 0 : index
      %33 = vector.load %arg5[%c0_22, %c0_23] : memref<1x64xf32, #tpu.memory_space<vmem>>, vector<1x64xf32>
      %34 = arith.mulf %21, %31 : vector<1x64xf32>
      %35 = arith.subf %33, %34 : vector<1x64xf32>
      %c0_24 = arith.constant 0 : index
      %c0_25 = arith.constant 0 : index
      %36 = vector.load %arg10[%c0_24, %c0_25] : memref<1x64xf32, #tpu.memory_space<vmem>>, vector<1x64xf32>
      tpu.vector_store %arg10[%c0_24, %c0_25], %35 {strides = array<i32>} : memref<1x64xf32, #tpu.memory_space<vmem>>, vector<1x64xf32>,
    } else {
    }
    %c1_i32 = arith.constant 1 : i32
    %16 = arith.cmpi eq, %arg0, %c1_i32 : i32
    %17 = arith.extui %16 : i1 to i32
    %c0_i32_10 = arith.constant 0 : i32
    %18 = arith.cmpi ne, %17, %c0_i32_10 : i32
    scf.if %18 {
      %c0_11 = arith.constant 0 : index
      %c0_12 = arith.constant 0 : index
      %19 = vector.load %arg9[%c0_11, %c0_12] : memref<1x64xf32, #tpu.memory_space<vmem>>, vector<1x64xf32>
      %20 = vector.broadcast %19 : vector<1x64xf32> to vector<8x64xf32>
      %21 = arith.mulf %2, %20 : vector<8x64xf32>
      %c0_13 = arith.constant 0 : index
      %c0_14 = arith.constant 0 : index
      %22 = vector.load %arg10[%c0_13, %c0_14] : memref<1x64xf32, #tpu.memory_space<vmem>>, vector<1x64xf32>
      %23 = vector.broadcast %22 : vector<1x64xf32> to vector<8x64xf32>
      %24 = arith.addf %21, %23 : vector<8x64xf32>
      %cst_15 = arith.constant 0.000000e+00 : f32
      %25 = vector.broadcast %cst_15 : f32 to vector<8x64xf32>
      %26 = arith.maximumf %24, %25 : vector<8x64xf32>
      %c0_16 = arith.constant 0 : index
      %c0_17 = arith.constant 0 : index
      %27 = vector.load %arg6[%c0_16, %c0_17] : memref<64x128xf32, #tpu.memory_space<vmem>>, vector<64x128xf32>
      %cst_18 = arith.constant dense<0.000000e+00> : vector<8x128xf32>
      %28 = tpu.matmul %26, %27, %cst_18 {dimension_numbers = #tpu.dot_dimension_numbers<[1], [0], [0], [1], [0, 0, 1, 1], [], []>} : vector<8x64xf32>, vector<64x128xf32>, vector<8x128xf32> -> vector<8x128xf32>
      %c0_19 = arith.constant 0 : index
      %c0_20 = arith.constant 0 : index
      %29 = vector.load %arg7[%c0_19, %c0_20] : memref<1x128xf32, #tpu.memory_space<vmem>>, vector<1x128xf32>
      %30 = vector.broadcast %29 : vector<1x128xf32> to vector<8x128xf32>
      %31 = arith.addf %28, %30 : vector<8x128xf32>
      %c0_21 = arith.constant 0 : index
      %c0_22 = arith.constant 0 : index
      %32 = vector.load %arg8[%c0_21, %c0_22] : memref<8x128xf32, #tpu.memory_space<vmem>>, vector<8x128xf32>
      tpu.vector_store %arg8[%c0_21, %c0_22], %31 {strides = array<i32>} : memref<8x128xf32, #tpu.memory_space<vmem>>, vector<8x128xf32>,
    } else {
    }
    return
  }
  func.func @transform_0(%arg0: i32, %arg1: i32) -> (i32, i32) {
    %c0_i32 = arith.constant 0 : i32
    %c0_i32_0 = arith.constant 0 : i32
    return %arg1, %c0_i32 : i32, i32
  }
  func.func @transform_1(%arg0: i32, %arg1: i32) -> (i32, i32) {
    %c0_i32 = arith.constant 0 : i32
    %c0_i32_0 = arith.constant 0 : i32
    %c0_i32_1 = arith.constant 0 : i32
    return %c0_i32, %c0_i32_0 : i32, i32
  }
  func.func @transform_2(%arg0: i32, %arg1: i32) -> (i32, i32) {
    %c0_i32 = arith.constant 0 : i32
    %c0_i32_0 = arith.constant 0 : i32
    %c0_i32_1 = arith.constant 0 : i32
    return %c0_i32, %c0_i32_0 : i32, i32
  }
  func.func @transform_3(%arg0: i32, %arg1: i32) -> (i32, i32) {
    %c0_i32 = arith.constant 0 : i32
    %c0_i32_0 = arith.constant 0 : i32
    %c0_i32_1 = arith.constant 0 : i32
    return %c0_i32, %c0_i32_0 : i32, i32
  }
  func.func @transform_4(%arg0: i32, %arg1: i32) -> (i32, i32) {
    %c0_i32 = arith.constant 0 : i32
    %c0_i32_0 = arith.constant 0 : i32
    %c0_i32_1 = arith.constant 0 : i32
    return %c0_i32, %c0_i32_0 : i32, i32
  }
  func.func @transform_5(%arg0: i32, %arg1: i32) -> (i32, i32) {
    %c0_i32 = arith.constant 0 : i32
    %c0_i32_0 = arith.constant 0 : i32
    %c0_i32_1 = arith.constant 0 : i32
    return %c0_i32, %c0_i32_0 : i32, i32
  }
  func.func @transform_6(%arg0: i32, %arg1: i32) -> (i32, i32) {
    %0 = arith.muli %arg0, %arg1 : i32
    %c0_i32 = arith.constant 0 : i32
    %c0_i32_0 = arith.constant 0 : i32
    return %0, %c0_i32 : i32, i32
  }
}

</mosaic_0001>

<llo_original>
// kernel: tpu_custom_call.1
$region0: #{tpu_custom_call.1}
  #allocation0 [shape = 'u32[]', space=smem, size = 0x4, offset = 0x4, fixed_abs, tag = 'smem constant byte address 0x4 - core index']
  #allocation1 [shape = 'u32[144,128]{1,0:T(1,128)}', space=vmem, size = 0x12000, scoped, tag = 'internal scratch']
  #allocation2 [shape = 'f32[1,64]{1,0:T(1,128)}', space=vmem, size = 0x200, scoped, tag = 'scratch operand']
  #allocation3 [shape = 'f32[1,64]{1,0:T(1,128)}', space=vmem, size = 0x200, scoped, tag = 'scratch operand']
  %s0 = inlined_call_operand.hbm [shape: f32[8,32], index: 0, kind: input, shape index: {}]
  %s1 = inlined_call_operand.hbm [shape: f32[32,64], index: 1, kind: input, shape index: {}]
  %s2 = inlined_call_operand.vmem [shape: f32[1,64], index: 2, kind: input, shape index: {}]
  %s3 = inlined_call_operand.vmem [shape: f32[1,64], index: 3, kind: input, shape index: {}]
  %s4 = inlined_call_operand.hbm [shape: f32[64,128], index: 4, kind: input, shape index: {}]
  %s5 = inlined_call_operand.vmem [shape: f32[1,128], index: 5, kind: input, shape index: {}]
  %s6 = inlined_call_operand.hbm [shape: f32[8,128], index: 6, kind: output, shape index: {}]
  %s7 = sld [smem:[#allocation0]]
  $region85: #{tpu_custom_call.1} parent=0
    _
  %s9 = ssub.s32 1, %s7
  %s10 = scalar_select 0, %s9, %s7
  $region1: #{tpu_custom_call.1} parent=0
    #allocation4 [shape = 'u8[4096]{0}', space=vmem, size = 0x1000, scoped, tag = 'input window, operand 0, single buffered']
    #allocation5 [shape = 's32[2]{0}', space=sflag, size = 0x8, scoped, tag = 'scoped memory for tpu_custom_call.1']
    #allocation6 [shape = 's32[2]{0}', space=sflag, size = 0x8, scoped, tag = 'scoped memory for tpu_custom_call.1']
    #allocation7 [shape = 'u8[16384]{0}', space=vmem, size = 0x4000, scoped, tag = 'input window, operand 1, single buffered']
    #allocation8 [shape = 's32[1]{0}', space=sflag, size = 0x4, scoped, tag = 'scoped memory for tpu_custom_call.1']
    #allocation9 [shape = 'u8[32768]{0}', space=vmem, size = 0x8000, scoped, tag = 'input window, operand 4, single buffered']
    #allocation10 [shape = 'u8[8192]{0}', space=vmem, size = 0x2000, scoped, tag = 'output window, operand 0']
    %11 = vsyncpa [#allocation5], 0
    %12 = vsyncpa [#allocation8], 0
    %13 = vsyncpa [#allocation6], 0
    %s14 = scalar_lea.sflag [#allocation6], 1
    %15 = vsyncpa %s14, 0
    loop: start=0, step=1, limit=4
    $region2: #{tpu_custom_call.1} parent=1 // loop_pre_header
      _
    $region3: #{tpu_custom_call.1} parent=1 // loop_header
      %s17 = sphi 0, %s21
      %p18 = scmp.ge.s32.totalorder %s17, 4
      %s24 = sphi 0, %s36
      %s25 = sphi 0, %s32
      %s26 = sphi 0, %s24
      %s27 = sphi 0, %s25
      %s28 = sphi 0, %s26
      %s29 = sphi 0, %s27
      %s39 = sphi 0, %s41
      %s42 = sphi 0, %s39
      %s43 = sphi 0, %s42
      %s59 = sphi 0, %s43
      %s63 = sphi 0, %s63
      %s65 = sphi 0, %s63
      %s66 = sphi 0, %s65
      %s80 = sphi 0, %s66
      %s84 = sphi 0, %s84
      %s86 = sphi 0, %s84
      %s87 = sphi 0, %s86
      %s101 = sphi 0, %s87
      %s105 = sphi 0, %s105
      %s107 = sphi 0, %s105
      %s108 = sphi 0, %s107
      %s122 = sphi 0, %s108
      %s126 = sphi 0, %s126
      %s128 = sphi 0, %s126
      %s129 = sphi 0, %s128
      %s143 = sphi 0, %s129
      %s147 = sphi 0, %s147
      %s149 = sphi 0, %s147
      %s150 = sphi 0, %s149
      %s164 = sphi 0, %s150
      %s172 = sphi 0, %s174
      %s175 = sphi 0, %s172
      %s176 = sphi 0, %s175
      %s192 = sphi 0, %s176
    $region4: #{tpu_custom_call.1} parent=1 // loop_header_branch
      %20 = sbr.rel (%p18) target = $region8
    $region5: #{tpu_custom_call.1} parent=1 // loop_body
      %s22 = ssub.s32 %s17, 1
      %s23 = ssub.s32 %s17, 2
      %s30 = sadd.s32 1, %s25
      %p31 = scmp.ge.s32.totalorder %s30, 1
      %s32 = scalar_select %p31, 0, %s30
      %s33 = sadd.s32 1, %s24
      %s34 = scalar_select %p31, %s33, %s24
      %p35 = scmp.ge.s32.totalorder %s34, 2
      %s36 = scalar_select %p35, 0, %s34
      %s37 = ssub.s32 %s25, %s32
      %p38 = scmp.eq.s32.totalorder %s37, 0
      %s40 = sadd.s32 %s39, 1
      %s41 = scalar_select %p38, %s39, %s40
      %p44 = pneg %p38
      %p45 = scmp.eq.s32.totalorder %s17, 1
      %p46 = por %p44, %p45
      %p47 = scmp.ne.s32.totalorder %s39, %s42
      %p48 = scmp.eq.s32.totalorder %s17, 0
      %p49 = por %p47, %p48
      %p50 = scmp.ne.s32.totalorder %s39, %s42
      %p51 = scmp.eq.s32.totalorder %s22, 1
      %p52 = por %p50, %p51
      %p53 = scmp.ne.s32.totalorder %s42, %s43
      %p54 = scmp.eq.s32.totalorder %s22, 0
      %p55 = por %p53, %p54
      %p56 = scmp.ne.s32.totalorder %s42, %s43
      %p57 = scmp.eq.s32.totalorder %s23, 1
      %p58 = por %p56, %p57
      %p60 = scmp.ne.s32.totalorder %s43, %s59
      %p61 = scmp.eq.s32.totalorder %s23, 0
      %p62 = por %p60, %p61
      %s64 = sadd.s32 %s63, 1
      %p67 = scmp.eq.s32.totalorder %s17, 1
      %p68 = scmp.ne.s32.totalorder %s63, %s65
      %p69 = scmp.eq.s32.totalorder %s17, 0
      %p70 = por %p68, %p69
      %p71 = scmp.ne.s32.totalorder %s63, %s65
      %p72 = scmp.eq.s32.totalorder %s22, 1
      %p73 = por %p71, %p72
      %p74 = scmp.ne.s32.totalorder %s65, %s66
      %p75 = scmp.eq.s32.totalorder %s22, 0
      %p76 = por %p74, %p75
      %p77 = scmp.ne.s32.totalorder %s65, %s66
      %p78 = scmp.eq.s32.totalorder %s23, 1
      %p79 = por %p77, %p78
      %p81 = scmp.ne.s32.totalorder %s66, %s80
      %p82 = scmp.eq.s32.totalorder %s23, 0
      %p83 = por %p81, %p82
      %s85 = sadd.s32 %s84, 1
      %p88 = scmp.eq.s32.totalorder %s17, 1
      %p89 = scmp.ne.s32.totalorder %s84, %s86
      %p90 = scmp.eq.s32.totalorder %s17, 0
      %p91 = por %p89, %p90
      %p92 = scmp.ne.s32.totalorder %s84, %s86
      %p93 = scmp.eq.s32.totalorder %s22, 1
      %p94 = por %p92, %p93
      %p95 = scmp.ne.s32.totalorder %s86, %s87
      %p96 = scmp.eq.s32.totalorder %s22, 0
      %p97 = por %p95, %p96
      %p98 = scmp.ne.s32.totalorder %s86, %s87
      %p99 = scmp.eq.s32.totalorder %s23, 1
      %p100 = por %p98, %p99
      %p102 = scmp.ne.s32.totalorder %s87, %s101
      %p103 = scmp.eq.s32.totalorder %s23, 0
      %p104 = por %p102, %p103
      %s106 = sadd.s32 %s105, 1
      %p109 = scmp.eq.s32.totalorder %s17, 1
      %p110 = scmp.ne.s32.totalorder %s105, %s107
      %p111 = scmp.eq.s32.totalorder %s17, 0
      %p112 = por %p110, %p111
      %p113 = scmp.ne.s32.totalorder %s105, %s107
      %p114 = scmp.eq.s32.totalorder %s22, 1
      %p115 = por %p113, %p114
      %p116 = scmp.ne.s32.totalorder %s107, %s108
      %p117 = scmp.eq.s32.totalorder %s22, 0
      %p118 = por %p116, %p117
      %p119 = scmp.ne.s32.totalorder %s107, %s108
      %p120 = scmp.eq.s32.totalorder %s23, 1
      %p121 = por %p119, %p120
      %p123 = scmp.ne.s32.totalorder %s108, %s122
      %p124 = scmp.eq.s32.totalorder %s23, 0
      %p125 = por %p123, %p124
      %s127 = sadd.s32 %s126, 1
      %p130 = scmp.eq.s32.totalorder %s17, 1
      %p131 = scmp.ne.s32.totalorder %s126, %s128
      %p132 = scmp.eq.s32.totalorder %s17, 0
      %p133 = por %p131, %p132
      %p134 = scmp.ne.s32.totalorder %s126, %s128
      %p135 = scmp.eq.s32.totalorder %s22, 1
      %p136 = por %p134, %p135
      %p137 = scmp.ne.s32.totalorder %s128, %s129
      %p138 = scmp.eq.s32.totalorder %s22, 0
      %p139 = por %p137, %p138
      %p140 = scmp.ne.s32.totalorder %s128, %s129
      %p141 = scmp.eq.s32.totalorder %s23, 1
      %p142 = por %p140, %p141
      %p144 = scmp.ne.s32.totalorder %s129, %s143
      %p145 = scmp.eq.s32.totalorder %s23, 0
      %p146 = por %p144, %p145
      %s148 = sadd.s32 %s147, 1
      %p151 = scmp.eq.s32.totalorder %s17, 1
      %p152 = scmp.ne.s32.totalorder %s147, %s149
      %p153 = scmp.eq.s32.totalorder %s17, 0
      %p154 = por %p152, %p153
      %p155 = scmp.ne.s32.totalorder %s147, %s149
      %p156 = scmp.eq.s32.totalorder %s22, 1
      %p157 = por %p155, %p156
      %p158 = scmp.ne.s32.totalorder %s149, %s150
      %p159 = scmp.eq.s32.totalorder %s22, 0
      %p160 = por %p158, %p159
      %p161 = scmp.ne.s32.totalorder %s149, %s150
      %p162 = scmp.eq.s32.totalorder %s23, 1
      %p163 = por %p161, %p162
      %p165 = scmp.ne.s32.totalorder %s150, %s164
      %p166 = scmp.eq.s32.totalorder %s23, 0
      %p167 = por %p165, %p166
      %s168 = smul.u32 %s24, %s25
      %s169 = smul.u32 %s36, %s32
      %s170 = ssub.s32 %s168, %s169
      %p171 = scmp.eq.s32.totalorder %s170, 0
      %s173 = sadd.s32 %s172, 1
      %s174 = scalar_select %p171, %s172, %s173
      %p177 = pneg %p171
      %p178 = scmp.eq.s32.totalorder %s17, 1
      %p179 = por %p177, %p178
      %p180 = scmp.ne.s32.totalorder %s172, %s175
      %p181 = scmp.eq.s32.totalorder %s17, 0
      %p182 = por %p180, %p181
      %p183 = scmp.ne.s32.totalorder %s172, %s175
      %p184 = scmp.eq.s32.totalorder %s22, 1
      %p185 = por %p183, %p184
      %p186 = scmp.ne.s32.totalorder %s175, %s176
      %p187 = scmp.eq.s32.totalorder %s22, 0
      %p188 = por %p186, %p187
      %p189 = scmp.ne.s32.totalorder %s175, %s176
      %p190 = scmp.eq.s32.totalorder %s23, 1
      %p191 = por %p189, %p190
      %p193 = scmp.ne.s32.totalorder %s176, %s192
      %p194 = scmp.eq.s32.totalorder %s23, 0
      %p195 = por %p193, %p194
      %p196 = scmp.le.s32.totalorder 1, %s17
      %p197 = scmp.lt.s32.totalorder %s17, 3
      %p198 = pnand %p196, %p197
      %p199 = pneg %p198
      // Predicated region
      $region9: #{tpu_custom_call.1} parent=5 // pred_check
        _
      $region10: #{tpu_custom_call.1} parent=5 // pred_check_branch
        %201 = sbr.rel (%p198) target = $region12
      $region11: #{tpu_custom_call.1} parent=5 // pred_region
        %s202 = ssub.s32 %s17, 1
        // Predicated region
        $region13: #{tpu_custom_call.1} parent=11 // pred_check
          %p203 = pneg %p55
        $region14: #{tpu_custom_call.1} parent=11 // pred_check_branch
          %205 = sbr.rel (%p203) target = $region16
        $region15: #{tpu_custom_call.1} parent=11 // pred_region
          %s207 = ssub.s32 128, 128
          %208 = vsyncadd [#allocation5], %s207
          %s209 = smul.addr %s27, 128
          %s210 = scalar_lea.hbm %s0, %s209
          %s212 = sshll.u32 [#allocation4], 4
          %s213 = int_to_ptr.vmem [resolvable:$true] %s212
          %215 = dma.hbm_to_vmem [thread:$0]  %s210, 128, %s213, [#allocation5]
        $region16: #{tpu_custom_call.1} parent=11 // pred_fallthru
          _
        // Predicated region
        $region17: #{tpu_custom_call.1} parent=11 // pred_check
          %p216 = pneg %p76
        $region18: #{tpu_custom_call.1} parent=11 // pred_check_branch
          %218 = sbr.rel (%p216) target = $region20
        $region19: #{tpu_custom_call.1} parent=11 // pred_region
          %s220 = ssub.s32 512, 512
          %221 = vsyncadd [#allocation8], %s220
          %s222 = sshll.u32 [#allocation7], 4
          %s223 = int_to_ptr.vmem [resolvable:$true] %s222
          %228 = dma.hbm_to_vmem [thread:$0]  %s1, 512, %s223, [#allocation8], 128, 128, 8
        $region20: #{tpu_custom_call.1} parent=11 // pred_fallthru
          _
        // Predicated region
        $region21: #{tpu_custom_call.1} parent=11 // pred_check
          %p229 = pneg %p97
        $region22: #{tpu_custom_call.1} parent=11 // pred_check_branch
          %231 = sbr.rel (%p229) target = $region24
        $region23: #{tpu_custom_call.1} parent=11 // pred_region
          _
        $region24: #{tpu_custom_call.1} parent=11 // pred_fallthru
          _
        // Predicated region
        $region25: #{tpu_custom_call.1} parent=11 // pred_check
          %p232 = pneg %p118
        $region26: #{tpu_custom_call.1} parent=11 // pred_check_branch
          %234 = sbr.rel (%p232) target = $region28
        $region27: #{tpu_custom_call.1} parent=11 // pred_region
          _
        $region28: #{tpu_custom_call.1} parent=11 // pred_fallthru
          _
        // Predicated region
        $region29: #{tpu_custom_call.1} parent=11 // pred_check
          %p235 = pneg %p139
        $region30: #{tpu_custom_call.1} parent=11 // pred_check_branch
          %237 = sbr.rel (%p235) target = $region32
        $region31: #{tpu_custom_call.1} parent=11 // pred_region
          %s239 = ssub.s32 1024, 1024
          %240 = vsyncadd [#allocation8], %s239
          %s241 = sshll.u32 [#allocation9], 4
          %s242 = int_to_ptr.vmem [resolvable:$true] %s241
          %247 = dma.hbm_to_vmem [thread:$0]  %s4, 1024, %s242, [#allocation8], 128, 128, 8
        $region32: #{tpu_custom_call.1} parent=11 // pred_fallthru
          _
        // Predicated region
        $region33: #{tpu_custom_call.1} parent=11 // pred_check
          %p248 = pneg %p160
        $region34: #{tpu_custom_call.1} parent=11 // pred_check_branch
          %250 = sbr.rel (%p248) target = $region36
        $region35: #{tpu_custom_call.1} parent=11 // pred_region
          _
        $region36: #{tpu_custom_call.1} parent=11 // pred_fallthru
          _
      $region12: #{tpu_custom_call.1} parent=5 // pred_fallthru
        _
      %p251 = scmp.lt.s32.totalorder %s17, 2
      // Predicated region
      $region37: #{tpu_custom_call.1} parent=5 // pred_check
        %p252 = pneg %p251
      $region38: #{tpu_custom_call.1} parent=5 // pred_check_branch
        %254 = sbr.rel (%p252) target = $region40
      $region39: #{tpu_custom_call.1} parent=5 // pred_region
        _
      $region40: #{tpu_custom_call.1} parent=5 // pred_fallthru
        _
      %p255 = scmp.le.s32.totalorder 1, %s17
      %p256 = scmp.lt.s32.totalorder %s17, 3
      %p257 = pnand %p255, %p256
      %p258 = pneg %p257
      // Predicated region
      $region41: #{tpu_custom_call.1} parent=5 // pred_check
        _
      $region42: #{tpu_custom_call.1} parent=5 // pred_check_branch
        %260 = sbr.rel (%p257) target = $region44
      $region43: #{tpu_custom_call.1} parent=5 // pred_region
        %s261 = ssub.s32 %s17, 1
        // Predicated region
        $region45: #{tpu_custom_call.1} parent=43 // pred_check
          %p262 = pneg %p55
        $region46: #{tpu_custom_call.1} parent=43 // pred_check_branch
          %264 = sbr.rel (%p262) target = $region48
        $region47: #{tpu_custom_call.1} parent=43 // pred_region
          %265 = dma.done [#allocation5], 128
        $region48: #{tpu_custom_call.1} parent=43 // pred_fallthru
          _
        // Predicated region
        $region49: #{tpu_custom_call.1} parent=43 // pred_check
          %p266 = pneg %p76
        $region50: #{tpu_custom_call.1} parent=43 // pred_check_branch
          %268 = sbr.rel (%p266) target = $region52
        $region51: #{tpu_custom_call.1} parent=43 // pred_region
          %269 = dma.done [#allocation8], 512
        $region52: #{tpu_custom_call.1} parent=43 // pred_fallthru
          _
        // Predicated region
        $region53: #{tpu_custom_call.1} parent=43 // pred_check
          %p270 = pneg %p139
        $region54: #{tpu_custom_call.1} parent=43 // pred_check_branch
          %272 = sbr.rel (%p270) target = $region56
        $region55: #{tpu_custom_call.1} parent=43 // pred_region
          %273 = dma.done [#allocation8], 1024
        $region56: #{tpu_custom_call.1} parent=43 // pred_fallthru
          _
        %p274 = pneg %p55
        %p275 = pneg %p52
        %p276 = pneg %p76
        %p277 = pneg %p73
        %p278 = pneg %p97
        %p279 = pneg %p94
        %p280 = pneg %p118
        %p281 = pneg %p115
        %p282 = pneg %p139
        %p283 = pneg %p136
        %p284 = pneg %p160
        %p285 = pneg %p157
        %p286 = pneg %p188
        %p287 = pneg %p185
        %s288 = sand.u32 %s175, 1
        %s289 = scalar_lea.sflag [#allocation6], %s288
        %s290 = sand.u32 %s175, 1
        %s291 = smul.addr %s290, 8
        %s292 = scalar_lea.vmem [#allocation10], %s291
        %s293 = smul.u32 %s26, %s27
        %v294 = vld [vmem:[#allocation4] sm:$0xff]
        %v295 = vld [vmem:[#allocation7] sm:$0xff]
        %v296 = vld [vmem:[#allocation7 + $0x8] sm:$0xff]
        %v297 = vld [vmem:[#allocation7 + $0x10] sm:$0xff]
        %v298 = vld [vmem:[#allocation7 + $0x18] sm:$0xff]
        %vm299 = vcmask 261120
        %v301 = vsel %vm299, %v294, 0
        %303 = vmatprep.subr.mxu0 0.0
        %304 = vmatpush1.msra.mxu0 0.0
        %305 = vmatprep.subr.mxu0 0.0
        %306 = vmatpush1.msra.mxu0 0.0
        %307 = vmatprep.subr.mxu0 0.0
        %308 = vmatpush1.msra.mxu0 0.0
        %309 = vmatprep.subr.mxu0 0.0
        %310 = vmatpush1.msra.mxu0 0.0
        %311 = vmatprep.subr.mxu0 0.0
        %312 = vmatpush1.msra.mxu0 0.0
        %313 = vmatprep.subr.mxu0 0.0
        %314 = vmatpush1.msra.mxu0 0.0
        %315 = vmatprep.subr.mxu0 0.0
        %316 = vmatpush1.msra.mxu0 0.0
        %317 = vmatprep.subr.mxu0 0.0
        %318 = vmatpush1.msra.mxu0 0.0
        %319 = vmatprep.subr.mxu0 0.0
        %320 = vmatpush1.msra.mxu0 0.0
        %321 = vmatprep.subr.mxu0 0.0
        %322 = vmatpush1.msra.mxu0 0.0
        %323 = vmatprep.subr.mxu0 0.0
        %324 = vmatpush1.msra.mxu0 0.0
        %325 = vmatprep.subr.mxu0 0.0
        %326 = vmatpush1.msra.mxu0 0.0
        %327 = vmatprep.subr.mxu0 0.0
        %328 = vmatpush1.msra.mxu0 %v298
        %329 = vmatprep.subr.mxu0 0.0
        %330 = vmatpush1.msra.mxu0 %v297
        %331 = vmatprep.subr.mxu0 0.0
        %332 = vmatpush1.msra.mxu0 %v296
        %333 = vmatprep.subr.mxu0 0.0
        %334 = vmatpush1.msra.mxu0 %v295
        %335 = vmatprep.subr.mxu0 0.0
        %336 = vmatpush2.msra.mxu0 0.0
        %337 = vmatprep.subr.mxu0 0.0
        %338 = vmatpush2.msra.mxu0 0.0
        %339 = vmatprep.subr.mxu0 0.0
        %340 = vmatpush2.msra.mxu0 0.0
        %341 = vmatprep.subr.mxu0 0.0
        %342 = vmatpush2.msra.mxu0 0.0
        %343 = vmatprep.subr.mxu0 0.0
        %344 = vmatpush2.msra.mxu0 0.0
        %345 = vmatprep.subr.mxu0 0.0
        %346 = vmatpush2.msra.mxu0 0.0
        %347 = vmatprep.subr.mxu0 0.0
        %348 = vmatpush2.msra.mxu0 0.0
        %349 = vmatprep.subr.mxu0 0.0
        %350 = vmatpush2.msra.mxu0 0.0
        %351 = vmatprep.subr.mxu0 0.0
        %352 = vmatpush2.msra.mxu0 0.0
        %353 = vmatprep.subr.mxu0 0.0
        %354 = vmatpush2.msra.mxu0 0.0
        %355 = vmatprep.subr.mxu0 0.0
        %356 = vmatpush2.msra.mxu0 0.0
        %357 = vmatprep.subr.mxu0 0.0
        %358 = vmatpush2.msra.mxu0 0.0
        %359 = vmatprep.subr.mxu0 0.0
        %360 = vmatpush2.msra.mxu0 0.0
        %361 = vmatprep.subr.mxu0 0.0
        %362 = vmatpush2.msra.mxu0 0.0
        %363 = vmatprep.subr.mxu0 0.0
        %364 = vmatpush2.msra.mxu0 0.0
        %365 = vmatprep.subr.mxu0 0.0
        %366 = vmatpush2.msra.mxu0 0.0
        %367 = vmatprep.mubr.f32.mxu0 0.0
        %368 = vmatmul.mubr.f32.gmra.mxu0 %v301
        %v369 = vpop.f32.mrf.mxu0
        %v370 = vadd.f32 0.0, %v369
        %v371 = vpop.f32.mrf.mxu0
        %372 = vdwg.mxu0
        %p373 = scmp.eq.s32.totalorder %s26, 0
        %p374 = scmp.eq.s32.totalorder %s27, 0
        %p375 = pnand %p373, %p374
        %p376 = pneg %p375
        // Predicated region
        $region57: #{tpu_custom_call.1} parent=43 // pred_check
          _
        $region58: #{tpu_custom_call.1} parent=43 // pred_check_branch
          %378 = sbr.rel (%p375) target = $region60
        $region59: #{tpu_custom_call.1} parent=43 // pred_region
          %vm379 = vcmask 516096
          %380 = vst.msk [vmem:[#allocation2] sm:$0x1] %vm379, 0.0
          %381 = vst.msk [vmem:[#allocation3] sm:$0x1] %vm379, 0.0
        $region60: #{tpu_custom_call.1} parent=43 // pred_fallthru
          _
        // Predicated region
        $region61: #{tpu_custom_call.1} parent=43 // pred_check
          %p382 = pneg %p373
        $region62: #{tpu_custom_call.1} parent=43 // pred_check_branch
          %384 = sbr.rel (%p382) target = $region64
        $region63: #{tpu_custom_call.1} parent=43 // pred_region
          %v385 = vld [vmem:[#allocation2] sm:$0x1]
          %vm386 = vcmask 523264
          %v387 = vsel %vm386, %v370, 0.0
          %v388 = vrot.slane %v387, 4
          %v389 = vadd.f32 %v387, %v388
          %v390 = vrot.slane %v389, 2
          %v391 = vadd.f32 %v389, %v390
          %v392 = vrot.slane %v391, 1
          %v393 = vadd.f32 %v391, %v392
          %v394 = vadd.f32 %v385, %v393
          %vm395 = vcmask 516096
          %396 = vst.msk [vmem:[#allocation2] sm:$0x1] %vm395, %v394
          %v397 = vld [vmem:[#allocation3] sm:$0x1]
          %v398 = vmul.f32 %v370, %v370
          %v399 = vsel %vm386, %v398, 0.0
          %v400 = vrot.slane %v399, 4
          %v401 = vadd.f32 %v399, %v400
          %v402 = vrot.slane %v401, 2
          %v403 = vadd.f32 %v401, %v402
          %v404 = vrot.slane %v403, 1
          %v405 = vadd.f32 %v403, %v404
          %v406 = vadd.f32 %v397, %v405
          %407 = vst.msk [vmem:[#allocation3] sm:$0x1] %vm395, %v406
        $region64: #{tpu_custom_call.1} parent=43 // pred_fallthru
          _
        // Predicated region
        $region65: #{tpu_custom_call.1} parent=43 // pred_check
          _
        $region66: #{tpu_custom_call.1} parent=43 // pred_check_branch
          %409 = sbr.rel (%p375) target = $region68
        $region67: #{tpu_custom_call.1} parent=43 // pred_region
          %v410 = vld [vmem:[#allocation2] sm:$0x1]
          %v411 = vmul.f32 %v410, 0.125
          %v412 = vld [vmem:[#allocation3] sm:$0x1]
          %v413 = vmul.f32 %v412, 0.125
          %v414 = vmul.f32 %v411, %v411
          %v415 = vsub.f32 %v413, %v414
          %v416 = vld [vmem:[%s2] sm:$0x1]
          %v417 = vadd.f32 %v415, 1e-05
          %v418 = vrsqrt.pop %v417
          %v419 = vmul.f32 %v416, %v418
          %vm420 = vcmask 516096
          %421 = vst.msk [vmem:[#allocation2] sm:$0x1] %vm420, %v419
          %v422 = vld [vmem:[%s3] sm:$0x1]
          %v423 = vmul.f32 %v411, %v419
          %v424 = vsub.f32 %v422, %v423
          %425 = vst.msk [vmem:[#allocation3] sm:$0x1] %vm420, %v424
        $region68: #{tpu_custom_call.1} parent=43 // pred_fallthru
          _
        %p426 = scmp.eq.s32.totalorder %s26, 1
        // Predicated region
        $region69: #{tpu_custom_call.1} parent=43 // pred_check
          %p427 = pneg %p426
        $region70: #{tpu_custom_call.1} parent=43 // pred_check_branch
          %429 = sbr.rel (%p427) target = $region72
        $region71: #{tpu_custom_call.1} parent=43 // pred_region
          %v430 = vld [vmem:[#allocation2] sm:$0x1]
          %v432 = vlaneseq
          %v433 = vshrl.u32 %v432, 7
          %v434 = vsub.s32 0, %v433
          %v435 = vrot.slane %v430, %v434
          %v437 = vmul.f32 %v370, %v435
          %v438 = vld [vmem:[#allocation3] sm:$0x1]
          %v440 = vlaneseq
          %v441 = vshrl.u32 %v440, 7
          %v442 = vsub.s32 0, %v441
          %v443 = vrot.slane %v438, %v442
          %v445 = vadd.f32 %v437, %v443
          %v446 = vmax.f32 %v445, 0.0
          %v447 = vld [vmem:[#allocation9] sm:$0xff]
          %v448 = vld [vmem:[#allocation9 + $0x8] sm:$0xff]
          %v449 = vld [vmem:[#allocation9 + $0x10] sm:$0xff]
          %v450 = vld [vmem:[#allocation9 + $0x18] sm:$0xff]
          %v451 = vld [vmem:[#allocation9 + $0x20] sm:$0xff]
          %v452 = vld [vmem:[#allocation9 + $0x28] sm:$0xff]
          %v453 = vld [vmem:[#allocation9 + $0x30] sm:$0xff]
          %v454 = vld [vmem:[#allocation9 + $0x38] sm:$0xff]
          %v455 = vld [vmem:[%s5] sm:$0x1]
          %v457 = vlaneseq
          %v458 = vshrl.u32 %v457, 7
          %v459 = vsub.s32 0, %v458
          %v460 = vrot.slane %v455, %v459
          %vm462 = vcmask 523264
          %v464 = vsel %vm462, %v446, 0
          %466 = vmatprep.subr.mxu0 0.0
          %467 = vmatpush1.msra.mxu0 0.0
          %468 = vmatprep.subr.mxu0 0.0
          %469 = vmatpush1.msra.mxu0 0.0
          %470 = vmatprep.subr.mxu0 0.0
          %471 = vmatpush1.msra.mxu0 0.0
          %472 = vmatprep.subr.mxu0 0.0
          %473 = vmatpush1.msra.mxu0 0.0
          %474 = vmatprep.subr.mxu0 0.0
          %475 = vmatpush1.msra.mxu0 0.0
          %476 = vmatprep.subr.mxu0 0.0
          %477 = vmatpush1.msra.mxu0 0.0
          %478 = vmatprep.subr.mxu0 0.0
          %479 = vmatpush1.msra.mxu0 0.0
          %480 = vmatprep.subr.mxu0 0.0
          %481 = vmatpush1.msra.mxu0 0.0
          %482 = vmatprep.subr.mxu0 0.0
          %483 = vmatpush1.msra.mxu0 %v454
          %484 = vmatprep.subr.mxu0 0.0
          %485 = vmatpush1.msra.mxu0 %v453
          %486 = vmatprep.subr.mxu0 0.0
          %487 = vmatpush1.msra.mxu0 %v452
          %488 = vmatprep.subr.mxu0 0.0
          %489 = vmatpush1.msra.mxu0 %v451
          %490 = vmatprep.subr.mxu0 0.0
          %491 = vmatpush1.msra.mxu0 %v450
          %492 = vmatprep.subr.mxu0 0.0
          %493 = vmatpush1.msra.mxu0 %v449
          %494 = vmatprep.subr.mxu0 0.0
          %495 = vmatpush1.msra.mxu0 %v448
          %496 = vmatprep.subr.mxu0 0.0
          %497 = vmatpush1.msra.mxu0 %v447
          %498 = vmatprep.subr.mxu0 0.0
          %499 = vmatpush2.msra.mxu0 0.0
          %500 = vmatprep.subr.mxu0 0.0
          %501 = vmatpush2.msra.mxu0 0.0
          %502 = vmatprep.subr.mxu0 0.0
          %503 = vmatpush2.msra.mxu0 0.0
          %504 = vmatprep.subr.mxu0 0.0
          %505 = vmatpush2.msra.mxu0 0.0
          %506 = vmatprep.subr.mxu0 0.0
          %507 = vmatpush2.msra.mxu0 0.0
          %508 = vmatprep.subr.mxu0 0.0
          %509 = vmatpush2.msra.mxu0 0.0
          %510 = vmatprep.subr.mxu0 0.0
          %511 = vmatpush2.msra.mxu0 0.0
          %512 = vmatprep.subr.mxu0 0.0
          %513 = vmatpush2.msra.mxu0 0.0
          %514 = vmatprep.subr.mxu0 0.0
          %515 = vmatpush2.msra.mxu0 0.0
          %516 = vmatprep.subr.mxu0 0.0
          %517 = vmatpush2.msra.mxu0 0.0
          %518 = vmatprep.subr.mxu0 0.0
          %519 = vmatpush2.msra.mxu0 0.0
          %520 = vmatprep.subr.mxu0 0.0
          %521 = vmatpush2.msra.mxu0 0.0
          %522 = vmatprep.subr.mxu0 0.0
          %523 = vmatpush2.msra.mxu0 0.0
          %524 = vmatprep.subr.mxu0 0.0
          %525 = vmatpush2.msra.mxu0 0.0
          %526 = vmatprep.subr.mxu0 0.0
          %527 = vmatpush2.msra.mxu0 0.0
          %528 = vmatprep.subr.mxu0 0.0
          %529 = vmatpush2.msra.mxu0 0.0
          %530 = vmatprep.mubr.f32.mxu0 0.0
          %531 = vmatmul.mubr.f32.gmra.mxu0 %v464
          %v532 = vpop.f32.mrf.mxu0
          %v533 = vadd.f32 %v460, %v532
          %v534 = vpop.f32.mrf.mxu0
          %535 = vdwg.mxu0
          %536 = vst [vmem:[%s292] sm:$0xff] %v533
        $region72: #{tpu_custom_call.1} parent=43 // pred_fallthru
          _
        %s537 = sand.u32 %s175, 1
        %s538 = scalar_lea.sflag [#allocation6], %s537
        %s539 = sand.u32 %s175, 1
        %s540 = smul.addr %s539, 8
        %s541 = scalar_lea.vmem [#allocation10], %s540
        // Predicated region
        $region73: #{tpu_custom_call.1} parent=43 // pred_check
          %p542 = pneg %p185
        $region74: #{tpu_custom_call.1} parent=43 // pred_check_branch
          %544 = sbr.rel (%p542) target = $region76
        $region75: #{tpu_custom_call.1} parent=43 // pred_region
          %s545 = smul.u32 %s26, %s27
          %s547 = ssub.s32 128, 128
          %548 = vsyncadd %s538, %s547
          %s549 = smul.addr %s545, 128
          %s550 = scalar_lea.hbm %s6, %s549
          %s552 = sshll.u32 %s541, 4
          %s553 = int_to_ptr.vmem [resolvable:$true] %s552
          %555 = dma.vmem_to_hbm [thread:$0]  %s553, 128, %s550, %s538
        $region76: #{tpu_custom_call.1} parent=43 // pred_fallthru
          _
      $region44: #{tpu_custom_call.1} parent=5 // pred_fallthru
        _
      %p556 = scmp.le.s32.totalorder 2, %s17
      // Predicated region
      $region77: #{tpu_custom_call.1} parent=5 // pred_check
        %p557 = pneg %p556
      $region78: #{tpu_custom_call.1} parent=5 // pred_check_branch
        %559 = sbr.rel (%p557) target = $region80
      $region79: #{tpu_custom_call.1} parent=5 // pred_region
        %s560 = ssub.s32 %s17, 2
        // Predicated region
        $region81: #{tpu_custom_call.1} parent=79 // pred_check
          %p561 = pneg %p191
        $region82: #{tpu_custom_call.1} parent=79 // pred_check_branch
          %563 = sbr.rel (%p561) target = $region84
        $region83: #{tpu_custom_call.1} parent=79 // pred_region
          %s564 = sand.u32 %s176, 1
          %s565 = scalar_lea.sflag [#allocation6], %s564
          %s566 = sand.u32 %s176, 1
          %s567 = smul.addr %s566, 8
          %s568 = scalar_lea.vmem [#allocation10], %s567
          %569 = dma.done %s565, 128
        $region84: #{tpu_custom_call.1} parent=79 // pred_fallthru
          _
      $region80: #{tpu_custom_call.1} parent=5 // pred_fallthru
        _
    $region6: #{tpu_custom_call.1} parent=1 // loop_footer
      %s21 = sadd.s32 1, %s17
    $region7: #{tpu_custom_call.1} parent=1 // loop_footer_branch
      %16 = sbr.rel target = $region3
    $region8: #{tpu_custom_call.1} parent=1 // loop_exit
      _
    %570 = vsyncpa [#allocation5], 1
    %s571 = scalar_lea.sflag [#allocation5], 1
    %572 = vsyncpa %s571, 1
    %573 = vsyncpa [#allocation8], 1
    %574 = vsyncpa [#allocation6], 1
    %s575 = scalar_lea.sflag [#allocation6], 1
    %576 = vsyncpa %s575, 1

</llo_original>
